<compile_context>
chip_gen: v7x
topology: tpu7x:2x2x1
jax: 0.10.0
libtpu: 0.0.40
codegen_flags: <defaults>
</compile_context>

<pallas_src>
import functools

import jax
import jax.numpy as jnp
from jax.experimental import pallas as pl
from jax.experimental.pallas import tpu as pltpu


# --------------------------------------------------------------------------
# Kernel
# --------------------------------------------------------------------------
def _sublstm_cell_kernel(xh_ref, cx_ref, w_ref, b_ref, hy_ref, cy_ref, *, th):
    # xh_ref: (TB, K)       cx_ref: (TB, TH)
    # w_ref:  (K, 4*TH)     b_ref:  (1, 4*TH)  (f32, already b_ih + b_hh)
    # hy_ref / cy_ref: (TB, TH)
    #
    # Single fused MXU matmul for all four gates, f32 accumulation; gates are
    # split along lanes at TH boundaries (128-aligned when TH >= 128).
    gates = jax.nn.sigmoid(
        jnp.dot(xh_ref[...], w_ref[...], preferred_element_type=jnp.float32)
        + b_ref[...])

    ingate = gates[:, 0 * th:1 * th]
    forgetgate = gates[:, 1 * th:2 * th]
    cellgate = gates[:, 2 * th:3 * th]
    outgate = gates[:, 3 * th:4 * th]

    cy = forgetgate * cx_ref[...].astype(jnp.float32) + (cellgate - ingate)
    hy = jnp.tanh(cy) - outgate

    cy_ref[...] = cy.astype(cy_ref.dtype)
    hy_ref[...] = hy.astype(hy_ref.dtype)


# --------------------------------------------------------------------------
# VMEM budget + tile selection
# --------------------------------------------------------------------------
def _vmem_limit_bytes():
    cap = None
    try:
        cap = int(getattr(pltpu.get_tpu_info(), "vmem_capacity_bytes", 0)) or None
    except Exception:
        cap = None
    if cap is None:
        cap = 64 * 1024 * 1024  # conservative fallback (v7x per-core size)
    return int(cap * 3 // 4)


def _pick_th(H, K, param_bytes, budget):
    # Prefer 256-multiples (v6e/v7x MXU is 256 wide); 128 fallback (fine on
    # v5e); full H for small hidden sizes. Weight block is double-buffered.
    cands = [c for c in (512, 256, 128) if H % c == 0] + [H]
    for th in cands:
        if 2 * 4 * K * th * param_bytes <= 0.6 * budget:
            return th
    # TODO(synk): for very large K*H add an inner K-reduction grid axis with a
    # f32 VMEM accumulator instead of shrinking tiles below MXU-friendly sizes.
    return cands[-1]


def _pick_tb(B, K, th, param_bytes, act_bytes, budget):
    remaining = budget - 2 * 4 * K * th * param_bytes
    if B <= 512:
        # Full batch when modest: fills the MXU M dimension, collapses the
        # inner grid axis, loads each weight block exactly once.
        cands = [B] + [c for c in (256, 128, 64, 32, 16, 8)
                       if B % c == 0 and c < B]
    else:
        cands = [c for c in (512, 256, 128, 64, 32, 16, 8) if B % c == 0] or [B]
    for tb in cands:
        need = (2 * tb * K * act_bytes          # xh block, double-buffered
                + 2 * 3 * tb * th * 4           # cx / hy / cy blocks
                + 2 * tb * 4 * th * 4)          # in-kernel f32 gates temporaries
        if need <= remaining:
            return tb
    return cands[-1]


# --------------------------------------------------------------------------
# One-time parameter re-layout (hoisted out of the per-step path)
# --------------------------------------------------------------------------
def prepare_sublstm_params(weight_ih, weight_hh, bias_ih, bias_hh, *,
                           param_dtype=jnp.bfloat16):
    """One-time weight/bias re-layout for the Pallas kernel.

    Call once (e.g. after loading parameters) and reuse the result for every
    timestep; this keeps the 4H x K transpose out of the per-step path.

    Returns (w, b):
      w: (H//TH, K, 4*TH)  param_dtype -- per hidden-tile, gate-major lanes
      b: (H//TH, 1, 4*TH)  float32     -- folded bias (b_ih + b_hh)
    """
    four_h, input_size = weight_ih.shape
    H = four_h // 4
    K = input_size + H
    param_bytes = jnp.dtype(param_dtype).itemsize
    th = _pick_th(H, K, param_bytes, _vmem_limit_bytes())
    nh = H // th

    # Fused projection: gates = [x | hx] @ w_cat.T + (b_ih + b_hh)
    w_cat = jnp.concatenate([weight_ih, weight_hh], axis=1)       # (4H, K)
    w = (w_cat.reshape(4, nh, th, K)
              .transpose(1, 3, 0, 2)                              # (nh, K, 4, th)
              .reshape(nh, K, 4 * th)
              .astype(param_dtype))
    b = ((bias_ih + bias_hh).reshape(4, nh, th)
                            .transpose(1, 0, 2)
                            .reshape(nh, 1, 4 * th)
                            .astype(jnp.float32))
    return w, b


# --------------------------------------------------------------------------
# Forward
# --------------------------------------------------------------------------
def sublstm_cell(x, state, w, b):
    """SubLSTMCell.forward with pre-laid-out params (prepare_sublstm_params).

    x: (B, input_size); state = (hx, cx), each (B, H).
    Returns (hy, (hy, cy)).
    """
    hx, cx = state
    B = x.shape[0]
    H = cx.shape[1]
    nh, K, four_th = w.shape
    th = four_th // 4
    assert nh * th == H and K == x.shape[1] + H

    param_dtype = w.dtype
    xh = jnp.concatenate([x, hx], axis=-1).astype(param_dtype)    # (B, K)
    out_dtype = x.dtype

    vmem_limit = _vmem_limit_bytes()
    tb = _pick_tb(B, K, th,
                  jnp.dtype(param_dtype).itemsize,
                  jnp.dtype(xh.dtype).itemsize,
                  int(0.8 * vmem_limit))
    nb = B // tb

    kernel = functools.partial(_sublstm_cell_kernel, th=th)

    # Grid: hidden tiles OUTER, batch tiles INNER -> weight/bias block index
    # (j, 0, 0) is constant across inner steps, so each weight block is DMA'd
    # once per hidden tile rather than once per (batch, hidden) tile.
    hy, cy = pl.pallas_call(
        kernel,
        out_shape=(jax.ShapeDtypeStruct((B, H), out_dtype),
                   jax.ShapeDtypeStruct((B, H), out_dtype)),
        grid=(nh, nb),
        in_specs=[
            pl.BlockSpec((tb, K), lambda j, i: (i, 0)),                # xh
            pl.BlockSpec((tb, th), lambda j, i: (i, j)),               # cx
            pl.BlockSpec((None, K, 4 * th), lambda j, i: (j, 0, 0)),   # weights
            pl.BlockSpec((None, 1, 4 * th), lambda j, i: (j, 0, 0)),   # bias
        ],
        out_specs=(
            pl.BlockSpec((tb, th), lambda j, i: (i, j)),               # hy
            pl.BlockSpec((tb, th), lambda j, i: (i, j)),               # cy
        ),
        compiler_params=pltpu.CompilerParams(
            # Hidden axis parallel (megacore shards the weight columns across
            # the two v7x TensorCores); batch axis serial per core.
            dimension_semantics=("parallel", "arbitrary"),
            vmem_limit_bytes=vmem_limit),
    )(xh, cx, w, b)

    # TODO(synk): for sequence workloads, move the time loop inside a single
    # pallas_call (weights stay VMEM-resident across steps; hx/cx carried in
    # scratch / input_output_aliases) instead of one call per timestep.
    # TODO(synk): after the grid reorder the weight block only changes on the
    # outer axis; single-buffering it via a manually-DMA'd VMEM scratch would
    # free 4*K*TH*dtype_bytes of VMEM for a larger TH/TB on v7x.
    return hy, (hy, cy)


def sublstm_cell_raw(x, state, weight_ih, weight_hh, bias_ih, bias_hh, *,
                     param_dtype=jnp.bfloat16):
    """Convenience wrapper matching the PyTorch signature (re-lays out the
    weights on every call; prefer prepare_sublstm_params + sublstm_cell)."""
    w, b = prepare_sublstm_params(weight_ih, weight_hh, bias_ih, bias_hh,
                                  param_dtype=param_dtype)
    return sublstm_cell(x, state, w, b)


# --------------------------------------------------------------------------
# Reference + tests
# --------------------------------------------------------------------------
def _reference(x, state, weight_ih, weight_hh, bias_ih, bias_hh):
    hx, cx = state
    gates = jax.nn.sigmoid(x @ weight_ih.T + bias_ih + hx @ weight_hh.T + bias_hh)
    H = hx.shape[1]
    i, f, g, o = (gates[:, :H], gates[:, H:2 * H],
                  gates[:, 2 * H:3 * H], gates[:, 3 * H:])
    cy = f * cx + (g - i)
    hy = jnp.tanh(cy) - o
    return hy, (hy, cy)


if __name__ == "__main__":
    # --- Test 1: small shapes consistent with the module (std-1 weights) ---
    batch, input_size, hidden_size = 8, 16, 32
    key = jax.random.PRNGKey(0)
    k_x, k_h, k_c, k_wih, k_whh, k_bih, k_bhh = jax.random.split(key, 7)

    x = jax.random.normal(k_x, (batch, input_size), dtype=jnp.float32)
    hx = jax.random.normal(k_h, (batch, hidden_size), dtype=jnp.float32)
    cx = jax.random.normal(k_c, (batch, hidden_size), dtype=jnp.float32)
    weight_ih = jax.random.normal(k_wih, (4 * hidden_size, input_size), dtype=jnp.float32)
    weight_hh = jax.random.normal(k_whh, (4 * hidden_size, hidden_size), dtype=jnp.float32)
    bias_ih = jax.random.normal(k_bih, (4 * hidden_size,), dtype=jnp.float32)
    bias_hh = jax.random.normal(k_bhh, (4 * hidden_size,), dtype=jnp.float32)

    hy_ref, (_, cy_ref) = _reference(x, (hx, cx), weight_ih, weight_hh, bias_ih, bias_hh)

    # Exact-semantics check with f32 params.
    w32, b32 = prepare_sublstm_params(weight_ih, weight_hh, bias_ih, bias_hh,
                                      param_dtype=jnp.float32)
    hy, (hy2, cy) = sublstm_cell(x, (hx, cx), w32, b32)
    jax.block_until_ready((hy, hy2, cy))
    assert jnp.allclose(hy, hy_ref, atol=1e-5, rtol=1e-5)
    assert jnp.allclose(cy, cy_ref, atol=1e-5, rtol=1e-5)

    # Default bf16-weight fast path (loose check: std-1 random weights amplify
    # bf16 rounding).
    wbf, bbf = prepare_sublstm_params(weight_ih, weight_hh, bias_ih, bias_hh)
    hy_b, (_, cy_b) = sublstm_cell(x, (hx, cx), wbf, bbf)
    jax.block_until_ready((hy_b, cy_b))
    assert float(jnp.max(jnp.abs(hy_b - hy_ref))) < 0.3
    assert float(jnp.max(jnp.abs(cy_b - cy_ref))) < 0.3

    # --- Test 2: larger shapes exercising the hidden-tile grid (nh > 1) ---
    batch, input_size, hidden_size = 24, 64, 384
    k2 = jax.random.PRNGKey(1)
    k_x, k_h, k_c, k_wih, k_whh, k_bih, k_bhh = jax.random.split(k2, 7)

    x = jax.random.normal(k_x, (batch, input_size), dtype=jnp.float32)
    hx = jax.random.normal(k_h, (batch, hidden_size), dtype=jnp.float32)
    cx = jax.random.normal(k_c, (batch, hidden_size), dtype=jnp.float32)
    weight_ih = 0.1 * jax.random.normal(k_wih, (4 * hidden_size, input_size), dtype=jnp.float32)
    weight_hh = 0.1 * jax.random.normal(k_whh, (4 * hidden_size, hidden_size), dtype=jnp.float32)
    bias_ih = 0.1 * jax.random.normal(k_bih, (4 * hidden_size,), dtype=jnp.float32)
    bias_hh = 0.1 * jax.random.normal(k_bhh, (4 * hidden_size,), dtype=jnp.float32)

    hy_ref, (_, cy_ref) = _reference(x, (hx, cx), weight_ih, weight_hh, bias_ih, bias_hh)

    # f32 exact path.
    w32, b32 = prepare_sublstm_params(weight_ih, weight_hh, bias_ih, bias_hh,
                                      param_dtype=jnp.float32)
    hy, (_, cy) = sublstm_cell(x, (hx, cx), w32, b32)
    jax.block_until_ready((hy, cy))
    assert jnp.allclose(hy, hy_ref, atol=1e-4, rtol=1e-4)
    assert jnp.allclose(cy, cy_ref, atol=1e-4, rtol=1e-4)

    # Default bf16-weight fast path (also via the raw convenience wrapper).
    hy_b, (_, cy_b) = sublstm_cell_raw(x, (hx, cx), weight_ih, weight_hh,
                                       bias_ih, bias_hh)
    jax.block_until_ready((hy_b, cy_b))
    assert jnp.allclose(hy_b, hy_ref, atol=5e-2, rtol=5e-2)
    assert jnp.allclose(cy_b, cy_ref, atol=5e-2, rtol=5e-2)

    print("KERNEL_OK")
</pallas_src>

<mosaic_0001>
module attributes {stable_mosaic.version = 11 : i64} {
  func.func @_sublstm_cell_kernel(%arg0: i32, %arg1: i32, %arg2: memref<8x48xf32, #tpu.memory_space<vmem>>, %arg3: memref<8x32xf32, #tpu.memory_space<vmem>>, %arg4: memref<1x48x128xf32, #tpu.memory_space<vmem>>, %arg5: memref<1x1x128xf32, #tpu.memory_space<vmem>>, %arg6: memref<8x32xf32, #tpu.memory_space<vmem>>, %arg7: memref<8x32xf32, #tpu.memory_space<vmem>>) attributes {dimension_semantics = [#tpu.dimension_semantics<parallel>, #tpu.dimension_semantics<arbitrary>], iteration_bounds = array<i64: 1, 1>, scalar_prefetch = 0 : i64, scratch_operands = 0 : i64, tpu.core_type = #tpu.core_type<tc>, window_params = [{transform_indices = @transform_0, window_bounds = array<i64: 8, 48>}, {transform_indices = @transform_1, window_bounds = array<i64: 8, 32>}, {transform_indices = @transform_2, window_bounds = array<i64: 1, 48, 128>}, {transform_indices = @transform_3, window_bounds = array<i64: 1, 1, 128>}, {transform_indices = @transform_4, window_bounds = array<i64: 8, 32>}, {transform_indices = @transform_5, window_bounds = array<i64: 8, 32>}]} {
    %c0 = arith.constant 0 : index
    %c0_0 = arith.constant 0 : index
    %0 = vector.load %arg2[%c0, %c0_0] : memref<8x48xf32, #tpu.memory_space<vmem>>, vector<8x48xf32>
    %c0_1 = arith.constant 0 : index
    %c0_2 = arith.constant 0 : index
    %c0_3 = arith.constant 0 : index
    %1 = vector.load %arg4[%c0_1, %c0_2, %c0_3] : memref<1x48x128xf32, #tpu.memory_space<vmem>>, vector<1x48x128xf32>
    %2 = vector.shape_cast %1 : vector<1x48x128xf32> to vector<48x128xf32>
    %cst = arith.constant dense<0.000000e+00> : vector<8x128xf32>
    %3 = tpu.matmul %0, %2, %cst {dimension_numbers = #tpu.dot_dimension_numbers<[1], [0], [0], [1], [0, 0, 1, 1], [], []>} : vector<8x48xf32>, vector<48x128xf32>, vector<8x128xf32> -> vector<8x128xf32>
    %c0_4 = arith.constant 0 : index
    %c0_5 = arith.constant 0 : index
    %c0_6 = arith.constant 0 : index
    %4 = vector.load %arg5[%c0_4, %c0_5, %c0_6] : memref<1x1x128xf32, #tpu.memory_space<vmem>>, vector<1x1x128xf32>
    %5 = vector.shape_cast %4 : vector<1x1x128xf32> to vector<1x128xf32>
    %6 = vector.broadcast %5 : vector<1x128xf32> to vector<8x128xf32>
    %7 = arith.addf %3, %6 : vector<8x128xf32>
    %8 = arith.negf %7 : vector<8x128xf32>
    %9 = math.exp %8 : vector<8x128xf32>
    %cst_7 = arith.constant 1.000000e+00 : f32
    %10 = vector.broadcast %cst_7 : f32 to vector<8x128xf32>
    %11 = arith.addf %10, %9 : vector<8x128xf32>
    %12 = arith.divf %10, %11 : vector<8x128xf32>
    %13 = vector.extract_strided_slice %12 {offsets = [0, 0], sizes = [8, 32], strides = [1, 1]} : vector<8x128xf32> to vector<8x32xf32>
    %14 = vector.extract_strided_slice %12 {offsets = [0, 32], sizes = [8, 32], strides = [1, 1]} : vector<8x128xf32> to vector<8x32xf32>
    %15 = vector.extract_strided_slice %12 {offsets = [0, 64], sizes = [8, 32], strides = [1, 1]} : vector<8x128xf32> to vector<8x32xf32>
    %16 = vector.extract_strided_slice %12 {offsets = [0, 96], sizes = [8, 32], strides = [1, 1]} : vector<8x128xf32> to vector<8x32xf32>
    %c0_8 = arith.constant 0 : index
    %c0_9 = arith.constant 0 : index
    %17 = vector.load %arg3[%c0_8, %c0_9] : memref<8x32xf32, #tpu.memory_space<vmem>>, vector<8x32xf32>
    %18 = arith.mulf %14, %17 : vector<8x32xf32>
    %19 = arith.subf %15, %13 : vector<8x32xf32>
    %20 = arith.addf %18, %19 : vector<8x32xf32>
    %21 = math.tanh %20 : vector<8x32xf32>
    %22 = arith.subf %21, %16 : vector<8x32xf32>
    %c0_10 = arith.constant 0 : index
    %c0_11 = arith.constant 0 : index
    %23 = vector.load %arg7[%c0_10, %c0_11] : memref<8x32xf32, #tpu.memory_space<vmem>>, vector<8x32xf32>
    tpu.vector_store %arg7[%c0_10, %c0_11], %20 {strides = array<i32>} : memref<8x32xf32, #tpu.memory_space<vmem>>, vector<8x32xf32>,
    %c0_12 = arith.constant 0 : index
    %c0_13 = arith.constant 0 : index
    %24 = vector.load %arg6[%c0_12, %c0_13] : memref<8x32xf32, #tpu.memory_space<vmem>>, vector<8x32xf32>
    tpu.vector_store %arg6[%c0_12, %c0_13], %22 {strides = array<i32>} : memref<8x32xf32, #tpu.memory_space<vmem>>, vector<8x32xf32>,
    return
  }
  func.func @transform_0(%arg0: i32, %arg1: i32) -> (i32, i32) {
    %c0_i32 = arith.constant 0 : i32
    %c0_i32_0 = arith.constant 0 : i32
    return %arg1, %c0_i32 : i32, i32
  }
  func.func @transform_1(%arg0: i32, %arg1: i32) -> (i32, i32) {
    %c0_i32 = arith.constant 0 : i32
    return %arg1, %arg0 : i32, i32
  }
  func.func @transform_2(%arg0: i32, %arg1: i32) -> (i32, i32, i32) {
    %c0_i32 = arith.constant 0 : i32
    %c0_i32_0 = arith.constant 0 : i32
    %c0_i32_1 = arith.constant 0 : i32
    return %arg0, %c0_i32, %c0_i32_0 : i32, i32, i32
  }
  func.func @transform_3(%arg0: i32, %arg1: i32) -> (i32, i32, i32) {
    %c0_i32 = arith.constant 0 : i32
    %c0_i32_0 = arith.constant 0 : i32
    %c0_i32_1 = arith.constant 0 : i32
    return %arg0, %c0_i32, %c0_i32_0 : i32, i32, i32
  }
  func.func @transform_4(%arg0: i32, %arg1: i32) -> (i32, i32) {
    %c0_i32 = arith.constant 0 : i32
    return %arg1, %arg0 : i32, i32
  }
  func.func @transform_5(%arg0: i32, %arg1: i32) -> (i32, i32) {
    %c0_i32 = arith.constant 0 : i32
    return %arg1, %arg0 : i32, i32
  }
}

</mosaic_0001>

<llo_original>
// kernel: tpu_custom_call.1
$region0: #{tpu_custom_call.1}
  #allocation0 [shape = 'u32[]', space=smem, size = 0x4, offset = 0x4, fixed_abs, tag = 'smem constant byte address 0x4 - core index']
  #allocation1 [shape = 'u32[144,128]{1,0:T(1,128)}', space=vmem, size = 0x12000, scoped, tag = 'internal scratch']
  %s0 = inlined_call_operand.hbm [shape: f32[8,48], index: 0, kind: input, shape index: {}]
  %s1 = inlined_call_operand.hbm [shape: f32[8,32], index: 1, kind: input, shape index: {}]
  %s2 = inlined_call_operand.hbm [shape: f32[1,48,128], index: 2, kind: input, shape index: {}]
  %s3 = inlined_call_operand.vmem [shape: f32[1,1,128], index: 3, kind: input, shape index: {}]
  %s4 = inlined_call_operand.hbm [shape: f32[8,32], index: 4, kind: output, shape index: {0}]
  %s5 = inlined_call_operand.hbm [shape: f32[8,32], index: 5, kind: output, shape index: {1}]
  %6 = xla_tuple %s4, %s5
  %s7 = sld [smem:[#allocation0]]
  $region46: #{tpu_custom_call.1} parent=0
    _
  %s9 = ssub.s32 1, %s7
  %s10 = scalar_select 0, %s9, %s7
  $region1: #{tpu_custom_call.1} parent=0
    #allocation2 [shape = 'u8[4096]{0}', space=vmem, size = 0x1000, scoped, tag = 'input window, operand 0, single buffered']
    #allocation3 [shape = 's32[1]{0}', space=sflag, size = 0x4, scoped, tag = 'scoped memory for tpu_custom_call.1']
    #allocation4 [shape = 's32[1]{0}', space=sflag, size = 0x4, scoped, tag = 'scoped memory for tpu_custom_call.1']
    #allocation5 [shape = 'u8[4096]{0}', space=vmem, size = 0x1000, scoped, tag = 'input window, operand 1, single buffered']
    #allocation6 [shape = 's32[1]{0}', space=sflag, size = 0x4, scoped, tag = 'scoped memory for tpu_custom_call.1']
    #allocation7 [shape = 'u8[24576]{0}', space=vmem, size = 0x6000, scoped, tag = 'input window, operand 2, single buffered']
    #allocation8 [shape = 'u8[4096]{0}', space=vmem, size = 0x1000, scoped, tag = 'output window, operand 0, single buffered']
    #allocation9 [shape = 'u8[4096]{0}', space=vmem, size = 0x1000, scoped, tag = 'output window, operand 1, single buffered']
    #allocation10 [shape = 's32[1]{0}', space=sflag, size = 0x4, scoped, tag = 'scoped memory for tpu_custom_call.1']
    %11 = vsyncpa [#allocation3], 0
    %12 = vsyncpa [#allocation6], 0
    %13 = vsyncpa [#allocation4], 0
    %14 = vsyncpa [#allocation10], 0
    // Predicated region
    $region2: #{tpu_custom_call.1} parent=1 // pred_check
      _
    $region3: #{tpu_custom_call.1} parent=1 // pred_check_branch
      %16 = sbr.rel (0) target = $region5
    $region4: #{tpu_custom_call.1} parent=1 // pred_region
      %s18 = ssub.s32 128, 128
      %19 = vsyncadd [#allocation3], %s18
      %s21 = sshll.u32 [#allocation2], 4
      %s22 = int_to_ptr.vmem [resolvable:$true] %s21
      %24 = dma.hbm_to_vmem [thread:$0]  %s0, 128, %s22, [#allocation3]
    $region5: #{tpu_custom_call.1} parent=1 // pred_fallthru
      _
    // Predicated region
    $region6: #{tpu_custom_call.1} parent=1 // pred_check
      _
    $region7: #{tpu_custom_call.1} parent=1 // pred_check_branch
      %26 = sbr.rel (0) target = $region9
    $region8: #{tpu_custom_call.1} parent=1 // pred_region
      %s28 = ssub.s32 128, 128
      %29 = vsyncadd [#allocation6], %s28
      %s31 = sshll.u32 [#allocation5], 4
      %s32 = int_to_ptr.vmem [resolvable:$true] %s31
      %34 = dma.hbm_to_vmem [thread:$0]  %s1, 128, %s32, [#allocation6]
    $region9: #{tpu_custom_call.1} parent=1 // pred_fallthru
      _
    // Predicated region
    $region10: #{tpu_custom_call.1} parent=1 // pred_check
      _
    $region11: #{tpu_custom_call.1} parent=1 // pred_check_branch
      %36 = sbr.rel (0) target = $region13
    $region12: #{tpu_custom_call.1} parent=1 // pred_region
      %s38 = ssub.s32 768, 768
      %39 = vsyncadd [#allocation6], %s38
      %s40 = sshll.u32 [#allocation7], 4
      %s41 = int_to_ptr.vmem [resolvable:$true] %s40
      %46 = dma.hbm_to_vmem [thread:$0]  %s2, 768, %s41, [#allocation6], 128, 128, 8
    $region13: #{tpu_custom_call.1} parent=1 // pred_fallthru
      _
    // Predicated region
    $region14: #{tpu_custom_call.1} parent=1 // pred_check
      _
    $region15: #{tpu_custom_call.1} parent=1 // pred_check_branch
      %48 = sbr.rel (0) target = $region17
    $region16: #{tpu_custom_call.1} parent=1 // pred_region
      _
    $region17: #{tpu_custom_call.1} parent=1 // pred_fallthru
      _
    // Predicated region
    $region18: #{tpu_custom_call.1} parent=1 // pred_check
      _
    $region19: #{tpu_custom_call.1} parent=1 // pred_check_branch
      %50 = sbr.rel (0) target = $region21
    $region20: #{tpu_custom_call.1} parent=1 // pred_region
      %51 = dma.done [#allocation3], 128
    $region21: #{tpu_custom_call.1} parent=1 // pred_fallthru
      _
    // Predicated region
    $region22: #{tpu_custom_call.1} parent=1 // pred_check
      _
    $region23: #{tpu_custom_call.1} parent=1 // pred_check_branch
      %53 = sbr.rel (0) target = $region25
    $region24: #{tpu_custom_call.1} parent=1 // pred_region
      %54 = dma.done [#allocation6], 128
    $region25: #{tpu_custom_call.1} parent=1 // pred_fallthru
      _
    // Predicated region
    $region26: #{tpu_custom_call.1} parent=1 // pred_check
      _
    $region27: #{tpu_custom_call.1} parent=1 // pred_check_branch
      %56 = sbr.rel (0) target = $region29
    $region28: #{tpu_custom_call.1} parent=1 // pred_region
      %57 = dma.done [#allocation6], 768
    $region29: #{tpu_custom_call.1} parent=1 // pred_fallthru
      _
    %v58 = vld [vmem:[#allocation2] sm:$0xff]
    %v59 = vld [vmem:[#allocation7] sm:$0xff]
    %v60 = vld [vmem:[#allocation7 + $0x8] sm:$0xff]
    %v61 = vld [vmem:[#allocation7 + $0x10] sm:$0xff]
    %v62 = vld [vmem:[#allocation7 + $0x18] sm:$0xff]
    %v63 = vld [vmem:[#allocation7 + $0x20] sm:$0xff]
    %v64 = vld [vmem:[#allocation7 + $0x28] sm:$0xff]
    %v65 = vld [vmem:[%s3] sm:$0x1]
    %v67 = vlaneseq
    %v68 = vshrl.u32 %v67, 7
    %v69 = vsub.s32 0, %v68
    %v70 = vrot.slane %v65, %v69
    %vm72 = vcmask 392192
    %v74 = vsel %vm72, %v58, 0
    %76 = vmatprep.subr.mxu0 0.0
    %77 = vmatpush1.msra.mxu0 %v59
    %78 = vmatprep.subr.mxu0 0.0
    %79 = vmatpush1.msra.mxu0 %v60
    %80 = vmatprep.subr.mxu0 0.0
    %81 = vmatpush1.msra.mxu0 %v61
    %82 = vmatprep.subr.mxu0 0.0
    %83 = vmatpush1.msra.mxu0 %v62
    %84 = vmatprep.subr.mxu0 0.0
    %85 = vmatpush1.msra.mxu0 %v63
    %86 = vmatprep.subr.mxu0 0.0
    %87 = vmatpush1.msra.mxu0 %v64
    %88 = vmatprep.subr.mxu0 0.0
    %89 = vmatpush1.msra.mxu0 0.0
    %90 = vmatprep.subr.mxu0 0.0
    %91 = vmatpush1.msra.mxu0 0.0
    %92 = vmatprep.subr.mxu0 0.0
    %93 = vmatpush1.msra.mxu0 0.0
    %94 = vmatprep.subr.mxu0 0.0
    %95 = vmatpush1.msra.mxu0 0.0
    %96 = vmatprep.subr.mxu0 0.0
    %97 = vmatpush1.msra.mxu0 0.0
    %98 = vmatprep.subr.mxu0 0.0
    %99 = vmatpush1.msra.mxu0 0.0
    %100 = vmatprep.subr.mxu0 0.0
    %101 = vmatpush1.msra.mxu0 0.0
    %102 = vmatprep.subr.mxu0 0.0
    %103 = vmatpush1.msra.mxu0 0.0
    %104 = vmatprep.subr.mxu0 0.0
    %105 = vmatpush1.msra.mxu0 0.0
    %106 = vmatprep.subr.mxu0 0.0
    %107 = vmatpush1.msra.mxu0 0.0
    %108 = vmatprep.subr.mxu0 0.0
    %109 = vmatpush1.msra.mxu0 0.0
    %110 = vmatprep.subr.mxu0 0.0
    %111 = vmatpush1.msra.mxu0 0.0
    %112 = vmatprep.subr.mxu0 0.0
    %113 = vmatpush1.msra.mxu0 0.0
    %114 = vmatprep.subr.mxu0 0.0
    %115 = vmatpush1.msra.mxu0 0.0
    %116 = vmatprep.subr.mxu0 0.0
    %117 = vmatpush1.msra.mxu0 0.0
    %118 = vmatprep.subr.mxu0 0.0
    %119 = vmatpush1.msra.mxu0 0.0
    %120 = vmatprep.subr.mxu0 0.0
    %121 = vmatpush1.msra.mxu0 0.0
    %122 = vmatprep.subr.mxu0 0.0
    %123 = vmatpush1.msra.mxu0 0.0
    %124 = vmatprep.subr.mxu0 0.0
    %125 = vmatpush1.msra.mxu0 0.0
    %126 = vmatprep.subr.mxu0 0.0
    %127 = vmatpush1.msra.mxu0 0.0
    %128 = vmatprep.subr.mxu0 0.0
    %129 = vmatpush1.msra.mxu0 0.0
    %130 = vmatprep.subr.mxu0 0.0
    %131 = vmatpush1.msra.mxu0 0.0
    %132 = vmatprep.subr.mxu0 0.0
    %133 = vmatpush1.msra.mxu0 0.0
    %134 = vmatprep.subr.mxu0 0.0
    %135 = vmatpush1.msra.mxu0 0.0
    %136 = vmatprep.subr.mxu0 0.0
    %137 = vmatpush1.msra.mxu0 0.0
    %138 = vmatprep.subr.mxu0 0.0
    %139 = vmatpush1.msra.mxu0 0.0
    %140 = vmatprep.mubr.f32.mxu0 0.0
    %141 = vmatmul.mubr.f32.gmra.mrb[0].mxu0 %v74
    %v142 = vpop.f32.mrb[0].mxu0
    %v143 = vadd.f32 %v70, %v142
    %v144 = vpop.f32.mrb[0].mxu0
    %145 = vdwg.mxu0
    %v146 = vxor.u32 %v143, 2147483648
    %v147 = vmul.f32 %v146, 1.442695
    %v148 = vpow.pop %v147
    %v149 = vadd.f32 %v148, 1.0
    %v150 = vrcp.pop %v149
    %v151 = vmul.f32 1.0, %v150
    %v152 = vld [vmem:[#allocation5] sm:$0xff]
    %154 = vrot.lane.b32.xlu0 %v152, 32
    %v155 = vpop.permute.xlu0 %154
    %v157 = vmul.f32 %v151, %v155
    %159 = vrot.lane.b32.xlu0 %v151, 64
    %v160 = vpop.permute.xlu0 %159
    %v162 = vsub.f32 %v151, %v160
    %164 = vrot.lane.b32.xlu0 %v162, 96
    %v165 = vpop.permute.xlu0 %164
    %v167 = vadd.f32 %v157, %v165
    %v168 = vtanh.pop %v167
    %v169 = vsub.f32 %v168, %v160
    %171 = vrot.lane.b32.xlu0 %v167, 96
    %v172 = vpop.permute.xlu0 %171
    %vm174 = vcmask 261120
    %175 = vst.msk [vmem:[#allocation9] sm:$0xff] %vm174, %v172
    %177 = vrot.lane.b32.xlu0 %v169, 96
    %v178 = vpop.permute.xlu0 %177
    %180 = vst.msk [vmem:[#allocation8] sm:$0xff] %vm174, %v178
    // Predicated region
    $region30: #{tpu_custom_call.1} parent=1 // pred_check
      _
    $region31: #{tpu_custom_call.1} parent=1 // pred_check_branch
      %182 = sbr.rel (0) target = $region33
    $region32: #{tpu_custom_call.1} parent=1 // pred_region
      %s184 = ssub.s32 128, 128
      %185 = vsyncadd [#allocation4], %s184
      %s187 = sshll.u32 [#allocation8], 4
      %s188 = int_to_ptr.vmem [resolvable:$true] %s187
      %190 = dma.vmem_to_hbm [thread:$0]  %s188, 128, %s4, [#allocation4]
    $region33: #{tpu_custom_call.1} parent=1 // pred_fallthru
      _
    // Predicated region
    $region34: #{tpu_custom_call.1} parent=1 // pred_check
      _
    $region35: #{tpu_custom_call.1} parent=1 // pred_check_branch
      %192 = sbr.rel (0) target = $region37
    $region36: #{tpu_custom_call.1} parent=1 // pred_region
      %s194 = ssub.s32 128, 128
      %195 = vsyncadd [#allocation10], %s194
      %s197 = sshll.u32 [#allocation9], 4
      %s198 = int_to_ptr.vmem [resolvable:$true] %s197
      %200 = dma.vmem_to_hbm [thread:$0]  %s198, 128, %s5, [#allocation10]
    $region37: #{tpu_custom_call.1} parent=1 // pred_fallthru
      _
    // Predicated region
    $region38: #{tpu_custom_call.1} parent=1 // pred_check
      _
    $region39: #{tpu_custom_call.1} parent=1 // pred_check_branch
      %202 = sbr.rel (0) target = $region41
    $region40: #{tpu_custom_call.1} parent=1 // pred_region
      %203 = dma.done [#allocation4], 128
    $region41: #{tpu_custom_call.1} parent=1 // pred_fallthru
      _
    // Predicated region
    $region42: #{tpu_custom_call.1} parent=1 // pred_check
      _
    $region43: #{tpu_custom_call.1} parent=1 // pred_check_branch
      %205 = sbr.rel (0) target = $region45
    $region44: #{tpu_custom_call.1} parent=1 // pred_region
      %206 = dma.done [#allocation10], 128
    $region45: #{tpu_custom_call.1} parent=1 // pred_fallthru
      _
    %207 = vsyncpa [#allocation3], 1
    %208 = vsyncpa [#allocation6], 1
    %209 = vsyncpa [#allocation4], 1
    %210 = vsyncpa [#allocation10], 1

</llo_original>
